<compile_context>
chip_gen: v7x
topology: tpu7x:2x2x1
jax: 0.10.0
libtpu: 0.0.40
codegen_flags: <defaults>
</compile_context>

<pallas_src>
import functools

import jax
import jax.numpy as jnp
from jax.experimental import pallas as pl
from jax.experimental.pallas import tpu as pltpu

LANE = 128  # TPU vreg lane width


def _round_up(n, m):
    return (n + m - 1) // m * m


def _cdiv(a, b):
    return -(-a // b)


def mlp_kernel(xt_ref, w1_ref, b1_ref, w2_ref, b2_ref, w3_ref, b3_ref, o_ref,
               *, chunk, n_chunks):
    """Transposed MLP: o = W3 @ tanh(W2 @ tanh(W1 @ x.T + b1) + b2) + b3.

    xt_ref : (D_in, tile_b)   bf16   (x.T tile; batch on the lane axis)
    wK_ref : (out_k, in_k)    bf16   (PyTorch weight layout)
    bK_ref : (out_k, 1)       f32
    o_ref  : (D_out, tile_b)  f32    (lane-dense stores)
    """
    bf = jnp.bfloat16
    # Weights / biases are tiny (<~15 KB total); keep them resident in vregs.
    w1 = w1_ref[...]
    b1 = b1_ref[...]
    w2 = w2_ref[...]
    b2 = b2_ref[...]
    w3 = w3_ref[...]
    b3 = b3_ref[...]

    # Static inner loop over lane chunks of the batch tile (static slices are
    # free); bounds the live f32 intermediates so they stay in registers.
    for c in range(n_chunks):
        sl = slice(c * chunk, (c + 1) * chunk)
        xc = xt_ref[:, sl]                                         # (D_in, chunk) bf16
        h1 = jnp.tanh(
            jnp.dot(w1, xc, preferred_element_type=jnp.float32) + b1
        )                                                          # (H1, chunk) f32
        h2 = jnp.tanh(
            jnp.dot(w2, h1.astype(bf), preferred_element_type=jnp.float32) + b2
        )                                                          # (H2, chunk) f32
        y = jnp.dot(w3, h2.astype(bf), preferred_element_type=jnp.float32) + b3
        o_ref[:, sl] = y.astype(o_ref.dtype)                       # (D_out, chunk) f32


@functools.partial(jax.jit, static_argnames=("max_tile_b",))
def mlp_forward(x, w1, b1, w2, b2, w3, b3, *, max_tile_b=1024):
    """x: (B, D_in) f32. Weights in PyTorch layout wK: (out, in), bK: (out,)."""
    B, D_in = x.shape
    H1 = w1.shape[0]
    H2 = w2.shape[0]
    D_out = w3.shape[0]

    # --- choose batch tiling ------------------------------------------------
    if B >= LANE:
        Bp = _round_up(B, LANE)
        n_lane_blocks = Bp // LANE
        max_blocks_per_tile = max(1, max_tile_b // LANE)
        if n_lane_blocks >= 2:
            # Keep >= 2 grid steps when possible (v7x megacore), but otherwise
            # take the largest tile to amortize per-grid-step overhead.
            max_blocks_per_tile = min(max_blocks_per_tile, _cdiv(n_lane_blocks, 2))
        blocks_per_tile = min(max_blocks_per_tile, n_lane_blocks)
        tile_b = blocks_per_tile * LANE
        Bp = _round_up(Bp, tile_b)
        chunk = LANE
    else:
        # Tiny batch: single grid step, single chunk, no padding.
        Bp = B
        tile_b = B
        chunk = B
    n_chunks = tile_b // chunk
    grid = (Bp // tile_b,)

    # --- prepare operands (layout plumbing done in the wrapper) -------------
    bf = jnp.bfloat16
    xt = x.astype(bf).T                                   # (D_in, B) bf16
    if Bp != B:
        xt = jnp.pad(xt, ((0, 0), (0, Bp - B)))           # zero-pad lanes

    w1b, w2b, w3b = (w.astype(bf) for w in (w1, w2, w3))
    b1c = b1.astype(jnp.float32).reshape(H1, 1)
    b2c = b2.astype(jnp.float32).reshape(H2, 1)
    b3c = b3.astype(jnp.float32).reshape(D_out, 1)

    kernel = functools.partial(mlp_kernel, chunk=chunk, n_chunks=n_chunks)

    # Weights/biases: constant index_map -> resident, no re-DMA across steps.
    full = lambda shape: pl.BlockSpec(shape, lambda i: (0, 0))

    out_t = pl.pallas_call(
        kernel,
        out_shape=jax.ShapeDtypeStruct((D_out, Bp), jnp.float32),
        grid_spec=pltpu.PrefetchScalarGridSpec(
            num_scalar_prefetch=0,
            grid=grid,
            in_specs=[
                pl.BlockSpec((D_in, tile_b), lambda i: (0, i)),   # x.T tile over batch
                full((H1, D_in)),
                full((H1, 1)),
                full((H2, H1)),
                full((H2, 1)),
                full((D_out, H2)),
                full((D_out, 1)),
            ],
            out_specs=pl.BlockSpec((D_out, tile_b), lambda i: (0, i)),
        ),
        compiler_params=pltpu.CompilerParams(
            dimension_semantics=("parallel",),
        ),
    )(xt, w1b, b1c, w2b, b2c, w3b, b3c)

    # (D_out, Bp) -> (B, D_out)
    return out_t[:, :B].T


# ----------------------------- references -----------------------------------
def reference_forward_f32(x, w1, b1, w2, b2, w3, b3):
    """Exact PyTorch semantics in f32: x @ W.T + b."""
    h1 = jnp.tanh(x @ w1.T + b1)
    h2 = jnp.tanh(h1 @ w2.T + b2)
    return h2 @ w3.T + b3


def reference_forward_bf16(x, w1, b1, w2, b2, w3, b3):
    """Mirrors the kernel's numerics: bf16 matmul inputs, f32 accumulation."""
    bf = jnp.bfloat16

    def dot(a, b):
        return jnp.dot(a.astype(bf), b.astype(bf),
                       preferred_element_type=jnp.float32)

    h1 = jnp.tanh(dot(x, w1.T) + b1)
    h2 = jnp.tanh(dot(h1, w2.T) + b2)
    return dot(h2, w3.T) + b3


def init_params(key, x_shape, y_shape):
    """Torch-layout params with nn.Linear's U(-1/sqrt(fan_in), 1/sqrt(fan_in)) init."""
    dims = [(x_shape, 100), (100, 40), (40, y_shape)]
    params = []
    for d_in, d_out in dims:
        key, kw, kb = jax.random.split(key, 3)
        bound = 1.0 / float(d_in) ** 0.5
        w = jax.random.uniform(kw, (d_out, d_in), jnp.float32, -bound, bound)
        b = jax.random.uniform(kb, (d_out,), jnp.float32, -bound, bound)
        params += [w, b]
    return params


if __name__ == "__main__":
    key = jax.random.PRNGKey(0)
    x_feat, y_feat = 32, 8

    key, kx = jax.random.split(key)
    w1, b1, w2, b2, w3, b3 = init_params(key, x_feat, y_feat)

    # (batch, max_tile_b): tiny single-step case, multi-step grid case,
    # and a non-multiple-of-128 batch exercising padding + slice-back.
    cases = ((16, 1024), (384, 128), (200, 1024))
    for batch, max_tile in cases:
        x = jax.random.normal(jax.random.fold_in(kx, batch),
                              (batch, x_feat), jnp.float32)

        out = mlp_forward(x, w1, b1, w2, b2, w3, b3, max_tile_b=max_tile)
        out = jax.block_until_ready(out)

        ref_bf = reference_forward_bf16(x, w1, b1, w2, b2, w3, b3)
        ref_32 = reference_forward_f32(x, w1, b1, w2, b2, w3, b3)

        assert out.shape == (batch, y_feat)
        assert out.dtype == jnp.float32
        assert jnp.allclose(out, ref_bf, atol=1e-2, rtol=1e-2), \
            f"mismatch vs bf16-matched reference (batch={batch})"
        assert jnp.allclose(out, ref_32, atol=5e-2, rtol=5e-2), \
            f"mismatch vs f32 reference (batch={batch})"

    print("KERNEL_OK")
</pallas_src>

<mosaic_0001>
module attributes {stable_mosaic.version = 11 : i64} {
  func.func @mlp_kernel(%arg0: i32, %arg1: memref<32x16xbf16, #tpu.memory_space<vmem>>, %arg2: memref<100x32xbf16, #tpu.memory_space<vmem>>, %arg3: memref<100x1xf32, #tpu.memory_space<vmem>>, %arg4: memref<40x100xbf16, #tpu.memory_space<vmem>>, %arg5: memref<40x1xf32, #tpu.memory_space<vmem>>, %arg6: memref<8x40xbf16, #tpu.memory_space<vmem>>, %arg7: memref<8x1xf32, #tpu.memory_space<vmem>>, %arg8: memref<8x16xf32, #tpu.memory_space<vmem>>) attributes {dimension_semantics = [#tpu.dimension_semantics<parallel>], iteration_bounds = array<i64: 1>, scalar_prefetch = 0 : i64, scratch_operands = 0 : i64, tpu.core_type = #tpu.core_type<tc>, window_params = [{transform_indices = @transform_0, window_bounds = array<i64: 32, 16>}, {pipeline_mode = #tpu.pipeline_mode<synchronous>, transform_indices = @transform_1, window_bounds = array<i64: 100, 32>}, {pipeline_mode = #tpu.pipeline_mode<synchronous>, transform_indices = @transform_2, window_bounds = array<i64: 100, 1>}, {pipeline_mode = #tpu.pipeline_mode<synchronous>, transform_indices = @transform_3, window_bounds = array<i64: 40, 100>}, {pipeline_mode = #tpu.pipeline_mode<synchronous>, transform_indices = @transform_4, window_bounds = array<i64: 40, 1>}, {pipeline_mode = #tpu.pipeline_mode<synchronous>, transform_indices = @transform_5, window_bounds = array<i64: 8, 40>}, {pipeline_mode = #tpu.pipeline_mode<synchronous>, transform_indices = @transform_6, window_bounds = array<i64: 8, 1>}, {transform_indices = @transform_7, window_bounds = array<i64: 8, 16>}]} {
    %c0 = arith.constant 0 : index
    %c0_0 = arith.constant 0 : index
    %0 = vector.load %arg2[%c0, %c0_0] : memref<100x32xbf16, #tpu.memory_space<vmem>>, vector<100x32xbf16>
    %c0_1 = arith.constant 0 : index
    %c0_2 = arith.constant 0 : index
    %1 = vector.load %arg3[%c0_1, %c0_2] : memref<100x1xf32, #tpu.memory_space<vmem>>, vector<100x1xf32>
    %c0_3 = arith.constant 0 : index
    %c0_4 = arith.constant 0 : index
    %2 = vector.load %arg4[%c0_3, %c0_4] : memref<40x100xbf16, #tpu.memory_space<vmem>>, vector<40x100xbf16>
    %c0_5 = arith.constant 0 : index
    %c0_6 = arith.constant 0 : index
    %3 = vector.load %arg5[%c0_5, %c0_6] : memref<40x1xf32, #tpu.memory_space<vmem>>, vector<40x1xf32>
    %c0_7 = arith.constant 0 : index
    %c0_8 = arith.constant 0 : index
    %4 = vector.load %arg6[%c0_7, %c0_8] : memref<8x40xbf16, #tpu.memory_space<vmem>>, vector<8x40xbf16>
    %c0_9 = arith.constant 0 : index
    %c0_10 = arith.constant 0 : index
    %5 = vector.load %arg7[%c0_9, %c0_10] : memref<8x1xf32, #tpu.memory_space<vmem>>, vector<8x1xf32>
    %c0_11 = arith.constant 0 : index
    %c0_12 = arith.constant 0 : index
    %6 = vector.load %arg1[%c0_11, %c0_12] : memref<32x16xbf16, #tpu.memory_space<vmem>>, vector<32x16xbf16>
    %cst = arith.constant dense<0.000000e+00> : vector<100x16xf32>
    %7 = tpu.matmul %0, %6, %cst {dimension_numbers = #tpu.dot_dimension_numbers<[1], [0], [0], [1], [0, 0, 1, 1], [], []>} : vector<100x32xbf16>, vector<32x16xbf16>, vector<100x16xf32> -> vector<100x16xf32>
    %8 = vector.broadcast %1 : vector<100x1xf32> to vector<100x16xf32>
    %9 = arith.addf %7, %8 : vector<100x16xf32>
    %10 = math.tanh %9 : vector<100x16xf32>
    %11 = arith.truncf %10 : vector<100x16xf32> to vector<100x16xbf16>
    %cst_13 = arith.constant dense<0.000000e+00> : vector<40x16xf32>
    %12 = tpu.matmul %2, %11, %cst_13 {dimension_numbers = #tpu.dot_dimension_numbers<[1], [0], [0], [1], [0, 0, 1, 1], [], []>} : vector<40x100xbf16>, vector<100x16xbf16>, vector<40x16xf32> -> vector<40x16xf32>
    %13 = vector.broadcast %3 : vector<40x1xf32> to vector<40x16xf32>
    %14 = arith.addf %12, %13 : vector<40x16xf32>
    %15 = math.tanh %14 : vector<40x16xf32>
    %16 = arith.truncf %15 : vector<40x16xf32> to vector<40x16xbf16>
    %cst_14 = arith.constant dense<0.000000e+00> : vector<8x16xf32>
    %17 = tpu.matmul %4, %16, %cst_14 {dimension_numbers = #tpu.dot_dimension_numbers<[1], [0], [0], [1], [0, 0, 1, 1], [], []>} : vector<8x40xbf16>, vector<40x16xbf16>, vector<8x16xf32> -> vector<8x16xf32>
    %18 = vector.broadcast %5 : vector<8x1xf32> to vector<8x16xf32>
    %19 = arith.addf %17, %18 : vector<8x16xf32>
    %c0_15 = arith.constant 0 : index
    %c0_16 = arith.constant 0 : index
    %20 = vector.load %arg8[%c0_15, %c0_16] : memref<8x16xf32, #tpu.memory_space<vmem>>, vector<8x16xf32>
    tpu.vector_store %arg8[%c0_15, %c0_16], %19 {strides = array<i32>} : memref<8x16xf32, #tpu.memory_space<vmem>>, vector<8x16xf32>,
    return
  }
  func.func @transform_0(%arg0: i32) -> (i32, i32) {
    %c0_i32 = arith.constant 0 : i32
    %c0_i32_0 = arith.constant 0 : i32
    return %c0_i32, %arg0 : i32, i32
  }
  func.func @transform_1(%arg0: i32) -> (i32, i32) {
    %c0_i32 = arith.constant 0 : i32
    %c0_i32_0 = arith.constant 0 : i32
    %c0_i32_1 = arith.constant 0 : i32
    return %c0_i32, %c0_i32_0 : i32, i32
  }
  func.func @transform_2(%arg0: i32) -> (i32, i32) {
    %c0_i32 = arith.constant 0 : i32
    %c0_i32_0 = arith.constant 0 : i32
    %c0_i32_1 = arith.constant 0 : i32
    return %c0_i32, %c0_i32_0 : i32, i32
  }
  func.func @transform_3(%arg0: i32) -> (i32, i32) {
    %c0_i32 = arith.constant 0 : i32
    %c0_i32_0 = arith.constant 0 : i32
    %c0_i32_1 = arith.constant 0 : i32
    return %c0_i32, %c0_i32_0 : i32, i32
  }
  func.func @transform_4(%arg0: i32) -> (i32, i32) {
    %c0_i32 = arith.constant 0 : i32
    %c0_i32_0 = arith.constant 0 : i32
    %c0_i32_1 = arith.constant 0 : i32
    return %c0_i32, %c0_i32_0 : i32, i32
  }
  func.func @transform_5(%arg0: i32) -> (i32, i32) {
    %c0_i32 = arith.constant 0 : i32
    %c0_i32_0 = arith.constant 0 : i32
    %c0_i32_1 = arith.constant 0 : i32
    return %c0_i32, %c0_i32_0 : i32, i32
  }
  func.func @transform_6(%arg0: i32) -> (i32, i32) {
    %c0_i32 = arith.constant 0 : i32
    %c0_i32_0 = arith.constant 0 : i32
    %c0_i32_1 = arith.constant 0 : i32
    return %c0_i32, %c0_i32_0 : i32, i32
  }
  func.func @transform_7(%arg0: i32) -> (i32, i32) {
    %c0_i32 = arith.constant 0 : i32
    %c0_i32_0 = arith.constant 0 : i32
    return %c0_i32, %arg0 : i32, i32
  }
}

</mosaic_0001>

<llo_original>
// kernel: mlp_forward.1
$region0: #{mlp_forward.1}
  #allocation0 [shape = 'u32[]', space=smem, size = 0x4, offset = 0x4, fixed_abs, tag = 'smem constant byte address 0x4 - core index']
  #allocation1 [shape = 'u32[144,128]{1,0:T(1,128)}', space=vmem, size = 0x12000, scoped, tag = 'internal scratch']
  %s0 = inlined_call_operand.vmem [shape: bf16[32,16], index: 0, kind: input, shape index: {}]
  %s1 = inlined_call_operand.vmem [shape: bf16[100,32], index: 1, kind: input, shape index: {}]
  %s2 = inlined_call_operand.vmem [shape: f32[100,1], index: 2, kind: input, shape index: {}]
  %s3 = inlined_call_operand.vmem [shape: bf16[40,100], index: 3, kind: input, shape index: {}]
  %s4 = inlined_call_operand.vmem [shape: f32[40,1], index: 4, kind: input, shape index: {}]
  %s5 = inlined_call_operand.vmem [shape: bf16[8,40], index: 5, kind: input, shape index: {}]
  %s6 = inlined_call_operand.vmem [shape: f32[8,1], index: 6, kind: input, shape index: {}]
  %s7 = inlined_call_operand.hbm [shape: f32[8,16], index: 7, kind: output, shape index: {}]
  %s8 = sld [smem:[#allocation0]]
  $region38: #{mlp_forward.1} parent=0
    _
  %s10 = ssub.s32 1, %s8
  %s11 = scalar_select 0, %s10, %s8
  $region1: #{mlp_forward.1} parent=0
    #allocation2 [shape = 'u8[4096]{0}', space=vmem, size = 0x1000, scoped, tag = 'output window, operand 0, single buffered']
    #allocation3 [shape = 's32[1]{0}', space=sflag, size = 0x4, scoped, tag = 'scoped memory for mlp_forward.1']
    %12 = vsyncpa [#allocation3], 0
    // Predicated region
    $region2: #{mlp_forward.1} parent=1 // pred_check
      _
    $region3: #{mlp_forward.1} parent=1 // pred_check_branch
      %14 = sbr.rel (0) target = $region5
    $region4: #{mlp_forward.1} parent=1 // pred_region
      _
    $region5: #{mlp_forward.1} parent=1 // pred_fallthru
      _
    // Predicated region
    $region6: #{mlp_forward.1} parent=1 // pred_check
      _
    $region7: #{mlp_forward.1} parent=1 // pred_check_branch
      %16 = sbr.rel (0) target = $region9
    $region8: #{mlp_forward.1} parent=1 // pred_region
      _
    $region9: #{mlp_forward.1} parent=1 // pred_fallthru
      _
    // Predicated region
    $region10: #{mlp_forward.1} parent=1 // pred_check
      _
    $region11: #{mlp_forward.1} parent=1 // pred_check_branch
      %18 = sbr.rel (0) target = $region13
    $region12: #{mlp_forward.1} parent=1 // pred_region
      _
    $region13: #{mlp_forward.1} parent=1 // pred_fallthru
      _
    // Predicated region
    $region14: #{mlp_forward.1} parent=1 // pred_check
      _
    $region15: #{mlp_forward.1} parent=1 // pred_check_branch
      %20 = sbr.rel (0) target = $region17
    $region16: #{mlp_forward.1} parent=1 // pred_region
      _
    $region17: #{mlp_forward.1} parent=1 // pred_fallthru
      _
    // Predicated region
    $region18: #{mlp_forward.1} parent=1 // pred_check
      _
    $region19: #{mlp_forward.1} parent=1 // pred_check_branch
      %22 = sbr.rel (0) target = $region21
    $region20: #{mlp_forward.1} parent=1 // pred_region
      _
    $region21: #{mlp_forward.1} parent=1 // pred_fallthru
      _
    // Predicated region
    $region22: #{mlp_forward.1} parent=1 // pred_check
      _
    $region23: #{mlp_forward.1} parent=1 // pred_check_branch
      %24 = sbr.rel (0) target = $region25
    $region24: #{mlp_forward.1} parent=1 // pred_region
      _
    $region25: #{mlp_forward.1} parent=1 // pred_fallthru
      _
    // Predicated region
    $region26: #{mlp_forward.1} parent=1 // pred_check
      _
    $region27: #{mlp_forward.1} parent=1 // pred_check_branch
      %26 = sbr.rel (0) target = $region29
    $region28: #{mlp_forward.1} parent=1 // pred_region
      _
    $region29: #{mlp_forward.1} parent=1 // pred_fallthru
      _
    %v28 = vld [vmem:[%s1] sm:$0xf]
    %v29 = vld [vmem:[%s1 + $0x4] sm:$0xf]
    %v30 = vld [vmem:[%s1 + $0x8] sm:$0xf]
    %v31 = vld [vmem:[%s1 + $0xc] sm:$0xf]
    %v32 = vld [vmem:[%s1 + $0x10] sm:$0xf]
    %v33 = vld [vmem:[%s1 + $0x14] sm:$0xf]
    %v34 = vld [vmem:[%s1 + $0x18] sm:$0xf]
    %v35 = vld [vmem:[%s1 + $0x1c] sm:$0xf]
    %v36 = vld [vmem:[%s1 + $0x20] sm:$0xf]
    %v37 = vld [vmem:[%s1 + $0x24] sm:$0xf]
    %v38 = vld [vmem:[%s1 + $0x28] sm:$0xf]
    %v39 = vld [vmem:[%s1 + $0x2c] sm:$0xf]
    %v40 = vld [vmem:[%s1 + $0x30] sm:$0x3]
    %v41 = vld [vmem:[%s2] sm:$0xff]
    %v42 = vld [vmem:[%s2 + $0x8] sm:$0xff]
    %v43 = vld [vmem:[%s2 + $0x10] sm:$0xff]
    %v44 = vld [vmem:[%s2 + $0x18] sm:$0xff]
    %v45 = vld [vmem:[%s2 + $0x20] sm:$0xff]
    %v46 = vld [vmem:[%s2 + $0x28] sm:$0xff]
    %v47 = vld [vmem:[%s2 + $0x30] sm:$0xff]
    %v48 = vld [vmem:[%s2 + $0x38] sm:$0xff]
    %v49 = vld [vmem:[%s2 + $0x40] sm:$0xff]
    %v50 = vld [vmem:[%s2 + $0x48] sm:$0xff]
    %v51 = vld [vmem:[%s2 + $0x50] sm:$0xff]
    %v52 = vld [vmem:[%s2 + $0x58] sm:$0xff]
    %v53 = vld [vmem:[%s2 + $0x60] sm:$0xf]
    %v54 = vld [vmem:[%s3] sm:$0xf]
    %v55 = vld [vmem:[%s3 + $0x4] sm:$0xf]
    %v56 = vld [vmem:[%s3 + $0x8] sm:$0xf]
    %v57 = vld [vmem:[%s3 + $0xc] sm:$0xf]
    %v58 = vld [vmem:[%s3 + $0x10] sm:$0xf]
    %v59 = vld [vmem:[%s4] sm:$0xff]
    %v60 = vld [vmem:[%s4 + $0x8] sm:$0xff]
    %v61 = vld [vmem:[%s4 + $0x10] sm:$0xff]
    %v62 = vld [vmem:[%s4 + $0x18] sm:$0xff]
    %v63 = vld [vmem:[%s4 + $0x20] sm:$0xff]
    %v64 = vld [vmem:[%s5] sm:$0xf]
    %v65 = vld [vmem:[%s6] sm:$0xff]
    %v66 = vld [vmem:[%s0] sm:$0xf]
    %v67 = vld [vmem:[%s0 + $0x4] sm:$0xf]
    %v68 = vld [vmem:[%s0 + $0x8] sm:$0xf]
    %v69 = vld [vmem:[%s0 + $0xc] sm:$0xf]
    %71 = vset.pattern.permute.xlu0 0
    %72 = vperm.xlu0 %71, %v41
    %v73 = vpop.permute.xlu0 %72
    %76 = vset.pattern.permute.xlu0 0
    %77 = vperm.xlu0 %76, %v42
    %v78 = vpop.permute.xlu0 %77
    %81 = vset.pattern.permute.xlu0 0
    %82 = vperm.xlu0 %81, %v43
    %v83 = vpop.permute.xlu0 %82
    %86 = vset.pattern.permute.xlu0 0
    %87 = vperm.xlu0 %86, %v44
    %v88 = vpop.permute.xlu0 %87
    %91 = vset.pattern.permute.xlu0 0
    %92 = vperm.xlu0 %91, %v45
    %v93 = vpop.permute.xlu0 %92
    %96 = vset.pattern.permute.xlu0 0
    %97 = vperm.xlu0 %96, %v46
    %v98 = vpop.permute.xlu0 %97
    %101 = vset.pattern.permute.xlu0 0
    %102 = vperm.xlu0 %101, %v47
    %v103 = vpop.permute.xlu0 %102
    %106 = vset.pattern.permute.xlu0 0
    %107 = vperm.xlu0 %106, %v48
    %v108 = vpop.permute.xlu0 %107
    %111 = vset.pattern.permute.xlu0 0
    %112 = vperm.xlu0 %111, %v49
    %v113 = vpop.permute.xlu0 %112
    %116 = vset.pattern.permute.xlu0 0
    %117 = vperm.xlu0 %116, %v50
    %v118 = vpop.permute.xlu0 %117
    %121 = vset.pattern.permute.xlu0 0
    %122 = vperm.xlu0 %121, %v51
    %v123 = vpop.permute.xlu0 %122
    %126 = vset.pattern.permute.xlu0 0
    %127 = vperm.xlu0 %126, %v52
    %v128 = vpop.permute.xlu0 %127
    %131 = vset.pattern.permute.xlu0 0
    %132 = vperm.xlu0 %131, %v53
    %v133 = vpop.permute.xlu0 %132
    %v148 = vunpack.c.l.b16 %v28
    %v149 = vunpack.c.l.b16 %v29
    %v150 = vunpack.c.l.b16 %v30
    %v151 = vunpack.c.l.b16 %v31
    %v152 = vunpack.c.l.b16 %v32
    %v153 = vunpack.c.l.b16 %v33
    %v154 = vunpack.c.l.b16 %v34
    %v155 = vunpack.c.l.b16 %v35
    %v156 = vunpack.c.l.b16 %v36
    %v157 = vunpack.c.l.b16 %v37
    %v158 = vunpack.c.l.b16 %v38
    %v159 = vunpack.c.l.b16 %v39
    %v160 = vunpack.c.l.b16 %v40
    %v161 = vpack.c.b16 %v149, %v148
    %v162 = vpack.c.b16 %v151, %v150
    %v163 = vpack.c.b16 %v153, %v152
    %v164 = vpack.c.b16 %v155, %v154
    %v165 = vpack.c.b16 %v157, %v156
    %v166 = vpack.c.b16 %v159, %v158
    %v167 = vpack.c.b16 %v160, %v160
    %v172 = vunpack.c.l.b16 %v66
    %v173 = vunpack.c.l.b16 %v67
    %v174 = vunpack.c.l.b16 %v68
    %v175 = vunpack.c.l.b16 %v69
    %v176 = vpack.c.b16 %v173, %v172
    %v177 = vpack.c.b16 %v175, %v174
    %vm180 = vcmask 261120
    %v182 = vsel %vm180, %v161, 0
    %v185 = vsel %vm180, %v162, 0
    %v188 = vsel %vm180, %v163, 0
    %v191 = vsel %vm180, %v164, 0
    %v194 = vsel %vm180, %v165, 0
    %v197 = vsel %vm180, %v166, 0
    %v200 = vsel %vm180, %v167, 0
    %202 = vmatprep.subr.bf16.mxu0 0
    %203 = vmatpush1.bf16.msra.mxu0 %v176
    %204 = vmatprep.subr.bf16.mxu0 0
    %205 = vmatpush1.bf16.msra.mxu0 %v177
    %206 = vmatprep.subr.bf16.mxu0 0
    %207 = vmatpush1.bf16.msra.mxu0 0
    %208 = vmatprep.subr.bf16.mxu0 0
    %209 = vmatpush1.bf16.msra.mxu0 0
    %210 = vmatprep.subr.bf16.mxu0 0
    %211 = vmatpush1.bf16.msra.mxu0 0
    %212 = vmatprep.subr.bf16.mxu0 0
    %213 = vmatpush1.bf16.msra.mxu0 0
    %214 = vmatprep.subr.bf16.mxu0 0
    %215 = vmatpush1.bf16.msra.mxu0 0
    %216 = vmatprep.subr.bf16.mxu0 0
    %217 = vmatpush1.bf16.msra.mxu0 0
    %218 = vmatprep.subr.bf16.mxu0 0
    %219 = vmatpush1.bf16.msra.mxu0 0
    %220 = vmatprep.subr.bf16.mxu0 0
    %221 = vmatpush1.bf16.msra.mxu0 0
    %222 = vmatprep.subr.bf16.mxu0 0
    %223 = vmatpush1.bf16.msra.mxu0 0
    %224 = vmatprep.subr.bf16.mxu0 0
    %225 = vmatpush1.bf16.msra.mxu0 0
    %226 = vmatprep.subr.bf16.mxu0 0
    %227 = vmatpush1.bf16.msra.mxu0 0
    %228 = vmatprep.subr.bf16.mxu0 0
    %229 = vmatpush1.bf16.msra.mxu0 0
    %230 = vmatprep.subr.bf16.mxu0 0
    %231 = vmatpush1.bf16.msra.mxu0 0
    %232 = vmatprep.subr.bf16.mxu0 0
    %233 = vmatpush1.bf16.msra.mxu0 0
    %234 = vmatprep.mubr.bf16.mxu0 0
    %235 = vmatmul.mubr.bf16.gmra.mrb[0].mxu0 %v182
    %v236 = vpop.f32.mrb[0].mxu0
    %v237 = vadd.f32 %v73, %v236
    %v238 = vpop.f32.mrb[0].mxu0
    %v239 = vpop.f32.mrb[0].mxu0
    %v240 = vadd.f32 %v78, %v239
    %v241 = vpop.f32.mrb[0].mxu0
    %242 = vmatprep.mubr.bf16.mxu0 0
    %243 = vmatmul.mubr.bf16.gmra.mrb[0].mxu0 %v185
    %v244 = vpop.f32.mrb[0].mxu0
    %v245 = vadd.f32 %v83, %v244
    %v246 = vpop.f32.mrb[0].mxu0
    %v247 = vpop.f32.mrb[0].mxu0
    %v248 = vadd.f32 %v88, %v247
    %v249 = vpop.f32.mrb[0].mxu0
    %250 = vmatprep.mubr.bf16.mxu0 0
    %251 = vmatmul.mubr.bf16.gmra.mrb[0].mxu0 %v188
    %v252 = vpop.f32.mrb[0].mxu0
    %v253 = vadd.f32 %v93, %v252
    %v254 = vpop.f32.mrb[0].mxu0
    %v255 = vpop.f32.mrb[0].mxu0
    %v256 = vadd.f32 %v98, %v255
    %v257 = vpop.f32.mrb[0].mxu0
    %258 = vmatprep.mubr.bf16.mxu0 0
    %259 = vmatmul.mubr.bf16.gmra.mrb[0].mxu0 %v191
    %v260 = vpop.f32.mrb[0].mxu0
    %v261 = vadd.f32 %v103, %v260
    %v262 = vpop.f32.mrb[0].mxu0
    %v263 = vpop.f32.mrb[0].mxu0
    %v264 = vadd.f32 %v108, %v263
    %v265 = vpop.f32.mrb[0].mxu0
    %266 = vmatprep.mubr.bf16.mxu0 0
    %267 = vmatmul.mubr.bf16.gmra.mrb[0].mxu0 %v194
    %v268 = vpop.f32.mrb[0].mxu0
    %v269 = vadd.f32 %v113, %v268
    %v270 = vpop.f32.mrb[0].mxu0
    %v271 = vpop.f32.mrb[0].mxu0
    %v272 = vadd.f32 %v118, %v271
    %v273 = vpop.f32.mrb[0].mxu0
    %274 = vmatprep.mubr.bf16.mxu0 0
    %275 = vmatmul.mubr.bf16.gmra.mrb[0].mxu0 %v197
    %v276 = vpop.f32.mrb[0].mxu0
    %v277 = vadd.f32 %v123, %v276
    %v278 = vpop.f32.mrb[0].mxu0
    %v279 = vpop.f32.mrb[0].mxu0
    %v280 = vadd.f32 %v128, %v279
    %v281 = vpop.f32.mrb[0].mxu0
    %282 = vmatprep.mubr.bf16.mxu0 0
    %283 = vmatmul.mubr.bf16.gmra.mrb[0].mxu0 %v200
    %v284 = vpop.f32.mrb[0].mxu0
    %v285 = vadd.f32 %v133, %v284
    %v286 = vpop.f32.mrb[0].mxu0
    %v287 = vpop.f32.mrb[0].mxu0
    %v288 = vpop.f32.mrb[0].mxu0
    %289 = vdwg.mxu0
    %v290 = vtanh.pop %v237
    %v291 = vtanh.pop %v240
    %v292 = vtanh.pop %v245
    %v293 = vtanh.pop %v248
    %v294 = vtanh.pop %v253
    %v295 = vtanh.pop %v256
    %v296 = vtanh.pop %v261
    %v297 = vtanh.pop %v264
    %v298 = vtanh.pop %v269
    %v299 = vtanh.pop %v272
    %v300 = vtanh.pop %v277
    %v301 = vtanh.pop %v280
    %v302 = vtanh.pop %v285
    %v303 = vpack.c.bf16 %v291, %v290
    %v304 = vpack.c.bf16 %v293, %v292
    %v305 = vpack.c.bf16 %v295, %v294
    %v306 = vpack.c.bf16 %v297, %v296
    %v307 = vpack.c.bf16 %v299, %v298
    %v308 = vpack.c.bf16 %v301, %v300
    %v309 = vpack.c.bf16 %v302, %v302
    %311 = vset.pattern.permute.xlu0 0
    %312 = vperm.xlu0 %311, %v59
    %v313 = vpop.permute.xlu0 %312
    %316 = vset.pattern.permute.xlu0 0
    %317 = vperm.xlu0 %316, %v60
    %v318 = vpop.permute.xlu0 %317
    %321 = vset.pattern.permute.xlu0 0
    %322 = vperm.xlu0 %321, %v61
    %v323 = vpop.permute.xlu0 %322
    %326 = vset.pattern.permute.xlu0 0
    %327 = vperm.xlu0 %326, %v62
    %v328 = vpop.permute.xlu0 %327
    %331 = vset.pattern.permute.xlu0 0
    %332 = vperm.xlu0 %331, %v63
    %v333 = vpop.permute.xlu0 %332
    %v340 = vunpack.c.l.b16 %v54
    %v341 = vunpack.c.l.b16 %v55
    %v342 = vunpack.c.l.b16 %v56
    %v343 = vunpack.c.l.b16 %v57
    %v344 = vunpack.c.l.b16 %v58
    %v345 = vpack.c.b16 %v341, %v340
    %v346 = vpack.c.b16 %v343, %v342
    %v347 = vpack.c.b16 %v344, %v344
    %vm348 = vcmask 818176
    %v350 = vsel %vm348, %v345, 0
    %v353 = vsel %vm348, %v346, 0
    %v356 = vsel %vm348, %v347, 0
    %vm358 = vcmask 1041408
    %v360 = vsel %vm358, %v309, 0
    %362 = vmatprep.subr.bf16.mxu0 0
    %363 = vmatpush1.bf16.msra.mxu0 %v303
    %364 = vmatprep.subr.bf16.mxu0 0
    %365 = vmatpush1.bf16.msra.mxu0 %v304
    %366 = vmatprep.subr.bf16.mxu0 0
    %367 = vmatpush1.bf16.msra.mxu0 %v305
    %368 = vmatprep.subr.bf16.mxu0 0
    %369 = vmatpush1.bf16.msra.mxu0 %v306
    %370 = vmatprep.subr.bf16.mxu0 0
    %371 = vmatpush1.bf16.msra.mxu0 %v307
    %372 = vmatprep.subr.bf16.mxu0 0
    %373 = vmatpush1.bf16.msra.mxu0 %v308
    %374 = vmatprep.subr.bf16.mxu0 0
    %375 = vmatpush1.bf16.msra.mxu0 %v360
    %376 = vmatprep.subr.bf16.mxu0 0
    %377 = vmatpush1.bf16.msra.mxu0 0
    %378 = vmatprep.subr.bf16.mxu0 0
    %379 = vmatpush1.bf16.msra.mxu0 0
    %380 = vmatprep.subr.bf16.mxu0 0
    %381 = vmatpush1.bf16.msra.mxu0 0
    %382 = vmatprep.subr.bf16.mxu0 0
    %383 = vmatpush1.bf16.msra.mxu0 0
    %384 = vmatprep.subr.bf16.mxu0 0
    %385 = vmatpush1.bf16.msra.mxu0 0
    %386 = vmatprep.subr.bf16.mxu0 0
    %387 = vmatpush1.bf16.msra.mxu0 0
    %388 = vmatprep.subr.bf16.mxu0 0
    %389 = vmatpush1.bf16.msra.mxu0 0
    %390 = vmatprep.subr.bf16.mxu0 0
    %391 = vmatpush1.bf16.msra.mxu0 0
    %392 = vmatprep.subr.bf16.mxu0 0
    %393 = vmatpush1.bf16.msra.mxu0 0
    %394 = vmatprep.mubr.bf16.mxu0 0
    %395 = vmatmul.mubr.bf16.gmra.mrb[0].mxu0 %v350
    %v396 = vpop.f32.mrb[0].mxu0
    %v397 = vadd.f32 %v313, %v396
    %v398 = vpop.f32.mrb[0].mxu0
    %v399 = vpop.f32.mrb[0].mxu0
    %v400 = vadd.f32 %v318, %v399
    %v401 = vpop.f32.mrb[0].mxu0
    %402 = vmatprep.mubr.bf16.mxu0 0
    %403 = vmatmul.mubr.bf16.gmra.mrb[0].mxu0 %v353
    %v404 = vpop.f32.mrb[0].mxu0
    %v405 = vadd.f32 %v323, %v404
    %v406 = vpop.f32.mrb[0].mxu0
    %v407 = vpop.f32.mrb[0].mxu0
    %v408 = vadd.f32 %v328, %v407
    %v409 = vpop.f32.mrb[0].mxu0
    %410 = vmatprep.mubr.bf16.mxu0 0
    %411 = vmatmul.mubr.bf16.gmra.mrb[0].mxu0 %v356
    %v412 = vpop.f32.mrb[0].mxu0
    %v413 = vadd.f32 %v333, %v412
    %v414 = vpop.f32.mrb[0].mxu0
    %v415 = vpop.f32.mrb[0].mxu0
    %v416 = vpop.f32.mrb[0].mxu0
    %417 = vdwg.mxu0
    %v418 = vtanh.pop %v397
    %v419 = vtanh.pop %v400
    %v420 = vtanh.pop %v405
    %v421 = vtanh.pop %v408
    %v422 = vtanh.pop %v413
    %v423 = vpack.c.bf16 %v419, %v418
    %v424 = vpack.c.bf16 %v421, %v420
    %v425 = vpack.c.bf16 %v422, %v422
    %427 = vset.pattern.permute.xlu0 0
    %428 = vperm.xlu0 %427, %v65
    %v429 = vpop.permute.xlu0 %428
    %vm431 = vcmask 326656
    %v433 = vsel %vm431, %v64, 0
    %vm435 = vcmask 1043456
    %v437 = vsel %vm435, %v425, 0
    %439 = vmatprep.subr.bf16.mxu0 0
    %440 = vmatpush1.bf16.msra.mxu0 %v423
    %441 = vmatprep.subr.bf16.mxu0 0
    %442 = vmatpush1.bf16.msra.mxu0 %v424
    %443 = vmatprep.subr.bf16.mxu0 0
    %444 = vmatpush1.bf16.msra.mxu0 %v437
    %445 = vmatprep.subr.bf16.mxu0 0
    %446 = vmatpush1.bf16.msra.mxu0 0
    %447 = vmatprep.subr.bf16.mxu0 0
    %448 = vmatpush1.bf16.msra.mxu0 0
    %449 = vmatprep.subr.bf16.mxu0 0
    %450 = vmatpush1.bf16.msra.mxu0 0
    %451 = vmatprep.subr.bf16.mxu0 0
    %452 = vmatpush1.bf16.msra.mxu0 0
    %453 = vmatprep.subr.bf16.mxu0 0
    %454 = vmatpush1.bf16.msra.mxu0 0
    %455 = vmatprep.subr.bf16.mxu0 0
    %456 = vmatpush1.bf16.msra.mxu0 0
    %457 = vmatprep.subr.bf16.mxu0 0
    %458 = vmatpush1.bf16.msra.mxu0 0
    %459 = vmatprep.subr.bf16.mxu0 0
    %460 = vmatpush1.bf16.msra.mxu0 0
    %461 = vmatprep.subr.bf16.mxu0 0
    %462 = vmatpush1.bf16.msra.mxu0 0
    %463 = vmatprep.subr.bf16.mxu0 0
    %464 = vmatpush1.bf16.msra.mxu0 0
    %465 = vmatprep.subr.bf16.mxu0 0
    %466 = vmatpush1.bf16.msra.mxu0 0
    %467 = vmatprep.subr.bf16.mxu0 0
    %468 = vmatpush1.bf16.msra.mxu0 0
    %469 = vmatprep.subr.bf16.mxu0 0
    %470 = vmatpush1.bf16.msra.mxu0 0
    %471 = vmatprep.mubr.bf16.mxu0 0
    %472 = vmatmul.mubr.bf16.gmra.mrb[0].mxu0 %v433
    %v473 = vpop.f32.mrb[0].mxu0
    %v474 = vadd.f32 %v429, %v473
    %v475 = vpop.f32.mrb[0].mxu0
    %v476 = vpop.f32.mrb[0].mxu0
    %v477 = vpop.f32.mrb[0].mxu0
    %478 = vdwg.mxu0
    %vm479 = vcmask 130048
    %480 = vst.msk [vmem:[#allocation2] sm:$0xff] %vm479, %v474
    // Predicated region
    $region30: #{mlp_forward.1} parent=1 // pred_check
      _
    $region31: #{mlp_forward.1} parent=1 // pred_check_branch
      %482 = sbr.rel (0) target = $region33
    $region32: #{mlp_forward.1} parent=1 // pred_region
      %s484 = ssub.s32 128, 128
      %485 = vsyncadd [#allocation3], %s484
      %s487 = sshll.u32 [#allocation2], 4
      %s488 = int_to_ptr.vmem [resolvable:$true] %s487
      %490 = dma.vmem_to_hbm [thread:$0]  %s488, 128, %s7, [#allocation3]
    $region33: #{mlp_forward.1} parent=1 // pred_fallthru
      _
    // Predicated region
    $region34: #{mlp_forward.1} parent=1 // pred_check
      _
    $region35: #{mlp_forward.1} parent=1 // pred_check_branch
      %492 = sbr.rel (0) target = $region37
    $region36: #{mlp_forward.1} parent=1 // pred_region
      %493 = dma.done [#allocation3], 128
    $region37: #{mlp_forward.1} parent=1 // pred_fallthru
      _
    %494 = vsyncpa [#allocation3], 1

</llo_original>
